<compile_context>
chip_gen: v7x
topology: tpu7x:2x2x1
jax: 0.10.0
libtpu: 0.0.40
codegen_flags: <defaults>
</compile_context>

<pallas_src>
import jax
import jax.numpy as jnp
from jax.experimental import pallas as pl
from jax.experimental.pallas import tpu as pltpu

DATA_NUM_CHANNELS = 3
INITIAL_WIDTH = 24
BN_EPS = 1e-5


def _round_up(a, b):
    return (a + b - 1) // b * b


# -------------- fused pass: conv-as-matmul + folded BN affine + ReLU ---------
def conv_bn_relu_kernel(p_ref, w_ref, ss_ref, o_ref):
    """p_ref:  (K_pad, TR)   bf16  transposed im2col patch tile (pixels on lanes)
       w_ref:  (Cout, K_pad) bf16  conv weight as a matmul
       ss_ref: (Cout, 2)     f32   per-channel [scale, shift] with BN folded in
       o_ref:  (Cout, TR)    f32   activation tile (lane-dense, unmasked vst)
    """
    y = jnp.dot(w_ref[...], p_ref[...], preferred_element_type=jnp.float32)
    scale = ss_ref[:, 0:1]                       # (Cout, 1) -> lane broadcast
    shift = ss_ref[:, 1:2]
    o_ref[...] = jnp.maximum(y * scale + shift, 0.0)


def tail_forward(x_nchw, w_oihw, gamma, beta, *, row_tile=2048):
    """Forward pass of Tail. x_nchw: (N, Cin, H, W) f32 -> (N, Cout, H, W) f32."""
    N, Cin, H, W = x_nchw.shape
    Cout, Cin_w, KH, KW = w_oihw.shape
    assert Cin == Cin_w and (KH, KW) == (3, 3)

    fp32 = jnp.float32
    HW = H * W
    R = N * HW                                       # real pixel count
    K = KH * KW * Cin                                # 27
    K_pad = _round_up(K, 8)                          # 27 -> 32 (sublane aligned)

    TR = min(_round_up(row_tile, 128), _round_up(HW, 128))   # lane tile
    assert TR % 128 == 0
    tiles_per_img = (HW + TR - 1) // TR
    HW_pad = tiles_per_img * TR

    # ---- XLA glue: NCHW -> padded NHWC -> per-image transposed im2col --------
    # (kept in bf16 end-to-end: the reference precision policy rounds conv
    #  inputs through bf16 anyway, and it halves the glue's HBM traffic)
    xb = x_nchw.astype(jnp.bfloat16)
    x = jnp.transpose(xb, (0, 2, 3, 1))                              # (N,H,W,Cin)
    xp = jnp.pad(x, ((0, 0), (1, 1), (1, 1), (0, 0)))                # (N,H+2,W+2,Cin)
    cols = [xp[:, kh:kh + H, kw:kw + W, :]                           # 9 x (N,H,W,Cin)
            for kh in range(3) for kw in range(3)]
    p_bf = jnp.stack(cols, axis=0)                                   # (9,N,H,W,Cin)
    p_bf = jnp.transpose(p_bf, (1, 0, 4, 2, 3)).reshape(N, K, HW)    # (N,27,H*W)
    p_bf = jnp.pad(p_bf, ((0, 0), (0, K_pad - K), (0, HW_pad - HW))) # zeros: exact

    # weight OIHW -> (Cout, kh, kw, cin) -> (Cout, 27) -> pad K -> bf16
    w_mat = jnp.transpose(w_oihw, (0, 2, 3, 1)).reshape(Cout, K)
    w_mat = jnp.pad(w_mat, ((0, 0), (0, K_pad - K)))
    w_bf = w_mat.astype(jnp.bfloat16)

    # ---- XLA glue: BN batch statistics from s and the tiny K x K Gram --------
    #   mean_c = (W s)_c / R,  E[y^2]_c = (W Gram W^T)_cc / R
    # Padded pixels / padded K rows are exact zeros -> contribute 0 to the sums.
    # NOTE: E[y^2] - mean^2 in f32 is cancellation-prone if |mean| >> std; the
    # clamp below keeps it safe (train-mode BN at these scales is fine).
    wf = w_bf.astype(fp32)                           # bf16-rounded W, matches kernel
    s = jnp.sum(p_bf.astype(fp32), axis=(0, 2))                      # (K_pad,)
    gram = jnp.einsum("nkp,nlp->kl", p_bf, p_bf,
                      preferred_element_type=fp32)                   # (K_pad,K_pad)
    cnt = jnp.float32(R)
    mean = (wf @ s) / cnt                                            # (Cout,)
    ey2 = jnp.sum((wf @ gram) * wf, axis=1) / cnt                    # diag(W G W^T)/R
    var = jnp.maximum(ey2 - mean * mean, 0.0)                        # clamp >= 0
    inv = jax.lax.rsqrt(var + BN_EPS)
    scale = gamma.astype(fp32) * inv
    shift = beta.astype(fp32) - mean * scale
    ss = jnp.stack([scale, shift], axis=1)                           # (Cout, 2)

    # ---- single fused Pallas pass over (image, pixel-tile) --------------------
    grid = (N, tiles_per_img)
    bytes_accessed = (N * K_pad * HW_pad * 2         # patches, read once
                      + Cout * K_pad * 2             # weight, DMA'd once
                      + Cout * 2 * 4                 # scale/shift, DMA'd once
                      + N * Cout * HW_pad * 4)       # output, written once
    flops = 2 * Cout * K_pad * HW_pad * N + 3 * Cout * HW_pad * N

    out_t = pl.pallas_call(
        conv_bn_relu_kernel,
        grid=grid,
        in_specs=[
            pl.BlockSpec((None, K_pad, TR), lambda n, i: (n, 0, i)),
            pl.BlockSpec((Cout, K_pad), lambda n, i: (0, 0)),
            pl.BlockSpec((Cout, 2), lambda n, i: (0, 0)),
        ],
        out_specs=pl.BlockSpec((None, Cout, TR), lambda n, i: (n, 0, i)),
        out_shape=jax.ShapeDtypeStruct((N, Cout, HW_pad), fp32),
        compiler_params=pltpu.CompilerParams(
            dimension_semantics=("parallel", "parallel"),
            vmem_limit_bytes=32 * 1024 * 1024),
        cost_estimate=pl.CostEstimate(
            flops=int(flops), transcendentals=0,
            bytes_accessed=int(bytes_accessed)),
    )(p_bf, w_bf, ss)

    # (N, Cout, HW_pad) -> NCHW: slice (no-op when HW % TR == 0) + free reshape;
    # no XLA transpose in the epilogue.
    return out_t[:, :, :HW].reshape(N, Cout, H, W)


def tail_reference(x_nchw, w_oihw, gamma, beta):
    """Pure-JAX reference with the same precision policy as the kernel:
    conv inputs rounded through bf16, all accumulation / BN math in f32,
    train-mode batch statistics (biased variance), eps=1e-5, ReLU."""
    xb = x_nchw.astype(jnp.bfloat16).astype(jnp.float32)
    wb = w_oihw.astype(jnp.bfloat16).astype(jnp.float32)
    y = jax.lax.conv_general_dilated(
        xb, wb, window_strides=(1, 1), padding=((1, 1), (1, 1)),
        dimension_numbers=("NCHW", "OIHW", "NCHW"))
    mean = jnp.mean(y, axis=(0, 2, 3), keepdims=True)
    var = jnp.var(y, axis=(0, 2, 3), keepdims=True)   # biased, like train BN
    y = (y - mean) / jnp.sqrt(var + BN_EPS)
    y = y * gamma.reshape(1, -1, 1, 1) + beta.reshape(1, -1, 1, 1)
    return jnp.maximum(y, 0.0)


if __name__ == "__main__":
    key = jax.random.PRNGKey(0)
    k_x, k_w, k_g, k_b = jax.random.split(key, 4)

    N, Cin, H, W = 2, DATA_NUM_CHANNELS, 16, 16
    Cout = INITIAL_WIDTH

    x = jax.random.normal(k_x, (N, Cin, H, W), dtype=jnp.float32)
    # Deterministic synthetic parameters (shapes from nn.Conv2d / nn.BatchNorm2d).
    w = jax.random.normal(k_w, (Cout, Cin, 3, 3), dtype=jnp.float32) * 0.1
    gamma = 1.0 + 0.1 * jax.random.normal(k_g, (Cout,), dtype=jnp.float32)
    beta = 0.1 * jax.random.normal(k_b, (Cout,), dtype=jnp.float32)

    out = jax.jit(tail_forward)(x, w, gamma, beta)
    out = jax.block_until_ready(out)

    ref = tail_reference(x, w, gamma, beta)
    assert out.shape == (N, Cout, H, W)
    max_err = jnp.max(jnp.abs(out - ref))
    assert jnp.allclose(out, ref, atol=2e-3, rtol=2e-3), f"max abs err {max_err}"

    print("KERNEL_OK")
</pallas_src>

<mosaic_0001>
module attributes {stable_mosaic.version = 11 : i64} {
  func.func @conv_bn_relu_kernel(%arg0: i32, %arg1: i32, %arg2: memref<1x32x256xbf16, #tpu.memory_space<vmem>>, %arg3: memref<24x32xbf16, #tpu.memory_space<vmem>>, %arg4: memref<24x2xf32, #tpu.memory_space<vmem>>, %arg5: memref<1x24x256xf32, #tpu.memory_space<vmem>>) attributes {dimension_semantics = [#tpu.dimension_semantics<parallel>, #tpu.dimension_semantics<parallel>], iteration_bounds = array<i64: 2, 1>, scalar_prefetch = 0 : i64, scratch_operands = 0 : i64, tpu.core_type = #tpu.core_type<tc>, window_params = [{transform_indices = @transform_0, window_bounds = array<i64: 1, 32, 256>}, {pipeline_mode = #tpu.pipeline_mode<synchronous>, transform_indices = @transform_1, window_bounds = array<i64: 24, 32>}, {pipeline_mode = #tpu.pipeline_mode<synchronous>, transform_indices = @transform_2, window_bounds = array<i64: 24, 2>}, {transform_indices = @transform_3, window_bounds = array<i64: 1, 24, 256>}]} {
    %c0 = arith.constant 0 : index
    %c0_0 = arith.constant 0 : index
    %0 = vector.load %arg3[%c0, %c0_0] : memref<24x32xbf16, #tpu.memory_space<vmem>>, vector<24x32xbf16>
    %c0_1 = arith.constant 0 : index
    %c0_2 = arith.constant 0 : index
    %c0_3 = arith.constant 0 : index
    %1 = vector.load %arg2[%c0_1, %c0_2, %c0_3] : memref<1x32x256xbf16, #tpu.memory_space<vmem>>, vector<1x32x256xbf16>
    %2 = vector.shape_cast %1 : vector<1x32x256xbf16> to vector<32x256xbf16>
    %cst = arith.constant dense<0.000000e+00> : vector<24x256xf32>
    %3 = tpu.matmul %0, %2, %cst {dimension_numbers = #tpu.dot_dimension_numbers<[1], [0], [0], [1], [0, 0, 1, 1], [], []>} : vector<24x32xbf16>, vector<32x256xbf16>, vector<24x256xf32> -> vector<24x256xf32>
    %c0_4 = arith.constant 0 : index
    %c0_5 = arith.constant 0 : index
    %4 = vector.load %arg4[%c0_4, %c0_5] : memref<24x2xf32, #tpu.memory_space<vmem>>, vector<24x1xf32>
    %c0_6 = arith.constant 0 : index
    %c1 = arith.constant 1 : index
    %5 = vector.load %arg4[%c0_6, %c1] : memref<24x2xf32, #tpu.memory_space<vmem>>, vector<24x1xf32>
    %6 = vector.broadcast %4 : vector<24x1xf32> to vector<24x256xf32>
    %7 = arith.mulf %3, %6 : vector<24x256xf32>
    %8 = vector.broadcast %5 : vector<24x1xf32> to vector<24x256xf32>
    %9 = arith.addf %7, %8 : vector<24x256xf32>
    %cst_7 = arith.constant 0.000000e+00 : f32
    %10 = vector.broadcast %cst_7 : f32 to vector<24x256xf32>
    %11 = arith.maximumf %9, %10 : vector<24x256xf32>
    %c0_8 = arith.constant 0 : index
    %c0_9 = arith.constant 0 : index
    %c0_10 = arith.constant 0 : index
    %12 = vector.load %arg5[%c0_8, %c0_9, %c0_10] : memref<1x24x256xf32, #tpu.memory_space<vmem>>, vector<1x24x256xf32>
    %13 = vector.shape_cast %12 : vector<1x24x256xf32> to vector<24x256xf32>
    %14 = vector.shape_cast %11 : vector<24x256xf32> to vector<1x24x256xf32>
    tpu.vector_store %arg5[%c0_8, %c0_9, %c0_10], %14 {strides = array<i32>} : memref<1x24x256xf32, #tpu.memory_space<vmem>>, vector<1x24x256xf32>,
    return
  }
  func.func @transform_0(%arg0: i32, %arg1: i32) -> (i32, i32, i32) {
    %c0_i32 = arith.constant 0 : i32
    %c0_i32_0 = arith.constant 0 : i32
    return %arg0, %c0_i32, %arg1 : i32, i32, i32
  }
  func.func @transform_1(%arg0: i32, %arg1: i32) -> (i32, i32) {
    %c0_i32 = arith.constant 0 : i32
    %c0_i32_0 = arith.constant 0 : i32
    %c0_i32_1 = arith.constant 0 : i32
    return %c0_i32, %c0_i32_0 : i32, i32
  }
  func.func @transform_2(%arg0: i32, %arg1: i32) -> (i32, i32) {
    %c0_i32 = arith.constant 0 : i32
    %c0_i32_0 = arith.constant 0 : i32
    %c0_i32_1 = arith.constant 0 : i32
    return %c0_i32, %c0_i32_0 : i32, i32
  }
  func.func @transform_3(%arg0: i32, %arg1: i32) -> (i32, i32, i32) {
    %c0_i32 = arith.constant 0 : i32
    %c0_i32_0 = arith.constant 0 : i32
    return %arg0, %c0_i32, %arg1 : i32, i32, i32
  }
}

</mosaic_0001>

<llo_original>
// kernel: tail_forward.1
$region0: #{tail_forward.1}
  #allocation0 [shape = 'u32[]', space=smem, size = 0x4, offset = 0x4, fixed_abs, tag = 'smem constant byte address 0x4 - core index']
  #allocation1 [shape = 'u32[144,128]{1,0:T(1,128)}', space=vmem, size = 0x12000, scoped, tag = 'internal scratch']
  %s0 = inlined_call_operand.vmem [shape: bf16[2,32,256], index: 0, kind: input, shape index: {}]
  %s1 = inlined_call_operand.vmem [shape: bf16[24,32], index: 1, kind: input, shape index: {}]
  %s2 = inlined_call_operand.vmem [shape: f32[24,2], index: 2, kind: input, shape index: {}]
  %s3 = inlined_call_operand.vmem [shape: f32[2,24,256], index: 3, kind: output, shape index: {}]
  %s4 = sld [smem:[#allocation0]]
  $region45: #{tail_forward.1} parent=0
    _
  %s6 = ssub.s32 1, %s4
  %s7 = scalar_select 0, %s6, %s4
  loop: start=0, step=1, limit=4
  $region2: #{tail_forward.1} parent=0 // loop_pre_header
    _
  $region3: #{tail_forward.1} parent=0 // loop_header
    %s9 = sphi 0, %s13
    %p10 = scmp.ge.s32.totalorder %s9, 4
    %s16 = sphi 0, %s28
    %s17 = sphi 0, %s24
    %s18 = sphi 0, %s16
    %s19 = sphi 0, %s17
    %s20 = sphi 0, %s18
    %s21 = sphi 0, %s19
    %s33 = sphi 0, %s35
    %s36 = sphi 0, %s33
    %s37 = sphi 0, %s36
    %s53 = sphi 0, %s37
    %s57 = sphi 0, %s57
    %s59 = sphi 0, %s57
    %s60 = sphi 0, %s59
    %s74 = sphi 0, %s60
    %s78 = sphi 0, %s78
    %s80 = sphi 0, %s78
    %s81 = sphi 0, %s80
    %s95 = sphi 0, %s81
    %s103 = sphi 0, %s105
    %s106 = sphi 0, %s103
    %s107 = sphi 0, %s106
    %s123 = sphi 0, %s107
  $region4: #{tail_forward.1} parent=0 // loop_header_branch
    %12 = sbr.rel (%p10) target = $region8
  $region5: #{tail_forward.1} parent=0 // loop_body
    %s14 = ssub.s32 %s9, 1
    %s15 = ssub.s32 %s9, 2
    %s22 = sadd.s32 1, %s17
    %p23 = scmp.ge.s32.totalorder %s22, 1
    %s24 = scalar_select %p23, 0, %s22
    %s25 = sadd.s32 1, %s16
    %s26 = scalar_select %p23, %s25, %s16
    %p27 = scmp.ge.s32.totalorder %s26, 2
    %s28 = scalar_select %p27, 0, %s26
    %s29 = ssub.s32 %s16, %s28
    %s30 = ssub.s32 %s17, %s24
    %s31 = sor.u32 %s29, %s30
    %p32 = scmp.eq.s32.totalorder %s31, 0
    %s34 = sadd.s32 %s33, 1
    %s35 = scalar_select %p32, %s33, %s34
    %p38 = pneg %p32
    %p39 = scmp.eq.s32.totalorder %s9, 1
    %p40 = por %p38, %p39
    %p41 = scmp.ne.s32.totalorder %s33, %s36
    %p42 = scmp.eq.s32.totalorder %s9, 0
    %p43 = por %p41, %p42
    %p44 = scmp.ne.s32.totalorder %s33, %s36
    %p45 = scmp.eq.s32.totalorder %s14, 1
    %p46 = por %p44, %p45
    %p47 = scmp.ne.s32.totalorder %s36, %s37
    %p48 = scmp.eq.s32.totalorder %s14, 0
    %p49 = por %p47, %p48
    %p50 = scmp.ne.s32.totalorder %s36, %s37
    %p51 = scmp.eq.s32.totalorder %s15, 1
    %p52 = por %p50, %p51
    %p54 = scmp.ne.s32.totalorder %s37, %s53
    %p55 = scmp.eq.s32.totalorder %s15, 0
    %p56 = por %p54, %p55
    %s58 = sadd.s32 %s57, 1
    %p61 = scmp.eq.s32.totalorder %s9, 1
    %p62 = scmp.ne.s32.totalorder %s57, %s59
    %p63 = scmp.eq.s32.totalorder %s9, 0
    %p64 = por %p62, %p63
    %p65 = scmp.ne.s32.totalorder %s57, %s59
    %p66 = scmp.eq.s32.totalorder %s14, 1
    %p67 = por %p65, %p66
    %p68 = scmp.ne.s32.totalorder %s59, %s60
    %p69 = scmp.eq.s32.totalorder %s14, 0
    %p70 = por %p68, %p69
    %p71 = scmp.ne.s32.totalorder %s59, %s60
    %p72 = scmp.eq.s32.totalorder %s15, 1
    %p73 = por %p71, %p72
    %p75 = scmp.ne.s32.totalorder %s60, %s74
    %p76 = scmp.eq.s32.totalorder %s15, 0
    %p77 = por %p75, %p76
    %s79 = sadd.s32 %s78, 1
    %p82 = scmp.eq.s32.totalorder %s9, 1
    %p83 = scmp.ne.s32.totalorder %s78, %s80
    %p84 = scmp.eq.s32.totalorder %s9, 0
    %p85 = por %p83, %p84
    %p86 = scmp.ne.s32.totalorder %s78, %s80
    %p87 = scmp.eq.s32.totalorder %s14, 1
    %p88 = por %p86, %p87
    %p89 = scmp.ne.s32.totalorder %s80, %s81
    %p90 = scmp.eq.s32.totalorder %s14, 0
    %p91 = por %p89, %p90
    %p92 = scmp.ne.s32.totalorder %s80, %s81
    %p93 = scmp.eq.s32.totalorder %s15, 1
    %p94 = por %p92, %p93
    %p96 = scmp.ne.s32.totalorder %s81, %s95
    %p97 = scmp.eq.s32.totalorder %s15, 0
    %p98 = por %p96, %p97
    %s99 = ssub.s32 %s16, %s28
    %s100 = ssub.s32 %s17, %s24
    %s101 = sor.u32 %s99, %s100
    %p102 = scmp.eq.s32.totalorder %s101, 0
    %s104 = sadd.s32 %s103, 1
    %s105 = scalar_select %p102, %s103, %s104
    %p108 = pneg %p102
    %p109 = scmp.eq.s32.totalorder %s9, 1
    %p110 = por %p108, %p109
    %p111 = scmp.ne.s32.totalorder %s103, %s106
    %p112 = scmp.eq.s32.totalorder %s9, 0
    %p113 = por %p111, %p112
    %p114 = scmp.ne.s32.totalorder %s103, %s106
    %p115 = scmp.eq.s32.totalorder %s14, 1
    %p116 = por %p114, %p115
    %p117 = scmp.ne.s32.totalorder %s106, %s107
    %p118 = scmp.eq.s32.totalorder %s14, 0
    %p119 = por %p117, %p118
    %p120 = scmp.ne.s32.totalorder %s106, %s107
    %p121 = scmp.eq.s32.totalorder %s15, 1
    %p122 = por %p120, %p121
    %p124 = scmp.ne.s32.totalorder %s107, %s123
    %p125 = scmp.eq.s32.totalorder %s15, 0
    %p126 = por %p124, %p125
    %p127 = scmp.le.s32.totalorder 1, %s9
    %p128 = scmp.lt.s32.totalorder %s9, 3
    %p129 = pnand %p127, %p128
    %p130 = pneg %p129
    // Predicated region
    $region9: #{tail_forward.1} parent=5 // pred_check
      _
    $region10: #{tail_forward.1} parent=5 // pred_check_branch
      %132 = sbr.rel (%p129) target = $region12
    $region11: #{tail_forward.1} parent=5 // pred_region
      %s133 = ssub.s32 %s9, 1
      // Predicated region
      $region13: #{tail_forward.1} parent=11 // pred_check
        %p134 = pneg %p70
      $region14: #{tail_forward.1} parent=11 // pred_check_branch
        %136 = sbr.rel (%p134) target = $region16
      $region15: #{tail_forward.1} parent=11 // pred_region
        _
      $region16: #{tail_forward.1} parent=11 // pred_fallthru
        _
      // Predicated region
      $region17: #{tail_forward.1} parent=11 // pred_check
        %p137 = pneg %p91
      $region18: #{tail_forward.1} parent=11 // pred_check_branch
        %139 = sbr.rel (%p137) target = $region20
      $region19: #{tail_forward.1} parent=11 // pred_region
        _
      $region20: #{tail_forward.1} parent=11 // pred_fallthru
        _
    $region12: #{tail_forward.1} parent=5 // pred_fallthru
      _
    %p140 = scmp.lt.s32.totalorder %s9, 2
    // Predicated region
    $region21: #{tail_forward.1} parent=5 // pred_check
      %p141 = pneg %p140
    $region22: #{tail_forward.1} parent=5 // pred_check_branch
      %143 = sbr.rel (%p141) target = $region24
    $region23: #{tail_forward.1} parent=5 // pred_region
      // Predicated region
      $region25: #{tail_forward.1} parent=23 // pred_check
        %p144 = pneg %p43
      $region26: #{tail_forward.1} parent=23 // pred_check_branch
        %146 = sbr.rel (%p144) target = $region28
      $region27: #{tail_forward.1} parent=23 // pred_region
        %s147 = smul.u32 2, %s17
        %p148 = scmp.lt.s32.totalorder %s16, 1
        %s149 = scalar_select %p148, %s16, 1
        %p150 = scmp.lt.s32.totalorder %s147, 1
        %s151 = scalar_select %p150, %s147, 1
        %s152 = smul.addr %s149, 8
        %s153 = sadd.s32 %s151, %s152
        %s154 = smul.addr %s153, 4
        %s155 = scalar_lea.vmem %s0, %s154
        %s156 = smul.u32 2, %s17
      $region28: #{tail_forward.1} parent=23 // pred_fallthru
        _
    $region24: #{tail_forward.1} parent=5 // pred_fallthru
      _
    %p157 = scmp.le.s32.totalorder 1, %s9
    %p158 = scmp.lt.s32.totalorder %s9, 3
    %p159 = pnand %p157, %p158
    %p160 = pneg %p159
    // Predicated region
    $region29: #{tail_forward.1} parent=5 // pred_check
      _
    $region30: #{tail_forward.1} parent=5 // pred_check_branch
      %162 = sbr.rel (%p159) target = $region32
    $region31: #{tail_forward.1} parent=5 // pred_region
      %s163 = ssub.s32 %s9, 1
      %s164 = smul.u32 2, %s19
      %p165 = scmp.lt.s32.totalorder %s18, 1
      %s166 = scalar_select %p165, %s18, 1
      %p167 = scmp.lt.s32.totalorder %s164, 1
      %s168 = scalar_select %p167, %s164, 1
      %s169 = smul.addr %s166, 8
      %s170 = sadd.s32 %s168, %s169
      %s171 = smul.addr %s170, 4
      %s172 = scalar_lea.vmem %s0, %s171
      %p173 = pneg %p49
      %p174 = pneg %p46
      %p175 = pneg %p70
      %p176 = pneg %p67
      %p177 = pneg %p91
      %p178 = pneg %p88
      %p179 = pneg %p119
      %p180 = pneg %p116
      %s181 = smul.u32 2, %s19
      %p182 = scmp.lt.s32.totalorder %s18, 1
      %s183 = scalar_select %p182, %s18, 1
      %p184 = scmp.lt.s32.totalorder %s181, 1
      %s185 = scalar_select %p184, %s181, 1
      %s186 = smul.addr %s183, 6
      %s187 = sadd.s32 %s185, %s186
      %s188 = smul.addr %s187, 8
      %s189 = scalar_lea.vmem %s3, %s188
      %s190 = smul.u32 2, %s19
      %p191 = scmp.lt.s32.totalorder %s18, 1
      %s192 = scalar_select %p191, %s18, 1
      %p193 = scmp.lt.s32.totalorder %s190, 1
      %s194 = scalar_select %p193, %s190, 1
      %s195 = smul.addr %s192, 8
      %s196 = sadd.s32 %s194, %s195
      %s197 = smul.addr %s196, 4
      %s198 = scalar_lea.vmem %s0, %s197
      %s199 = smul.u32 2, %s19
      %s200 = smul.u32 2, %s19
      %p201 = scmp.lt.s32.totalorder %s18, 1
      %s202 = scalar_select %p201, %s18, 1
      %p203 = scmp.lt.s32.totalorder %s200, 1
      %s204 = scalar_select %p203, %s200, 1
      %s205 = smul.addr %s202, 6
      %s206 = sadd.s32 %s204, %s205
      %s207 = smul.addr %s206, 8
      %s208 = scalar_lea.vmem %s3, %s207
      %s209 = smul.u32 2, %s19
      %v211 = vld [vmem:[%s1] sm:$0xf]
      %v212 = vld [vmem:[%s1 + $0x4] sm:$0xf]
      %v213 = vld [vmem:[%s1 + $0x8] sm:$0xf]
      %v214 = vld [vmem:[%s198] sm:$0xff]
      %v215 = vld [vmem:[%s198 + $0x8] sm:$0xff]
      %v216 = vld [vmem:[%s198 + $0x10] sm:$0xff]
      %v217 = vld [vmem:[%s198 + $0x18] sm:$0xff]
      %v221 = vunpack.c.l.b16 %v211
      %v222 = vunpack.c.l.b16 %v212
      %v223 = vunpack.c.l.b16 %v213
      %v224 = vpack.c.b16 %v222, %v221
      %v225 = vpack.c.b16 %v223, %v223
      %v230 = vunpack.c.l.b16 %v214
      %v231 = vunpack.c.h.b16 %v214
      %v232 = vunpack.c.l.b16 %v215
      %v233 = vunpack.c.h.b16 %v215
      %v234 = vunpack.c.l.b16 %v216
      %v235 = vunpack.c.h.b16 %v216
      %v236 = vunpack.c.l.b16 %v217
      %v237 = vunpack.c.h.b16 %v217
      %v238 = vpack.c.b16 %v232, %v230
      %v239 = vpack.c.b16 %v233, %v231
      %v240 = vpack.c.b16 %v236, %v234
      %v241 = vpack.c.b16 %v237, %v235
      %vm246 = vcmask 261120
      %v248 = vsel %vm246, %v224, 0
      %v251 = vsel %vm246, %v225, 0
      %253 = vmatprep.subr.bf16.mxu0 %v239
      %254 = vmatpush1.bf16.msra.mxu0 %v238
      %255 = vmatprep.subr.bf16.mxu0 %v241
      %256 = vmatpush1.bf16.msra.mxu0 %v240
      %257 = vmatprep.subr.bf16.mxu0 0
      %258 = vmatpush1.bf16.msra.mxu0 0
      %259 = vmatprep.subr.bf16.mxu0 0
      %260 = vmatpush1.bf16.msra.mxu0 0
      %261 = vmatprep.subr.bf16.mxu0 0
      %262 = vmatpush1.bf16.msra.mxu0 0
      %263 = vmatprep.subr.bf16.mxu0 0
      %264 = vmatpush1.bf16.msra.mxu0 0
      %265 = vmatprep.subr.bf16.mxu0 0
      %266 = vmatpush1.bf16.msra.mxu0 0
      %267 = vmatprep.subr.bf16.mxu0 0
      %268 = vmatpush1.bf16.msra.mxu0 0
      %269 = vmatprep.subr.bf16.mxu0 0
      %270 = vmatpush1.bf16.msra.mxu0 0
      %271 = vmatprep.subr.bf16.mxu0 0
      %272 = vmatpush1.bf16.msra.mxu0 0
      %273 = vmatprep.subr.bf16.mxu0 0
      %274 = vmatpush1.bf16.msra.mxu0 0
      %275 = vmatprep.subr.bf16.mxu0 0
      %276 = vmatpush1.bf16.msra.mxu0 0
      %277 = vmatprep.subr.bf16.mxu0 0
      %278 = vmatpush1.bf16.msra.mxu0 0
      %279 = vmatprep.subr.bf16.mxu0 0
      %280 = vmatpush1.bf16.msra.mxu0 0
      %281 = vmatprep.subr.bf16.mxu0 0
      %282 = vmatpush1.bf16.msra.mxu0 0
      %283 = vmatprep.subr.bf16.mxu0 0
      %284 = vmatpush1.bf16.msra.mxu0 0
      %285 = vmatprep.mubr.bf16.mxu0 0
      %286 = vmatmul.mubr.bf16.gmra.mrb[0].mxu0 %v248
      %v287 = vpop.f32.mrb[0].mxu0
      %v288 = vadd.f32 0.0, %v287
      %v289 = vpop.f32.mrb[0].mxu0
      %v290 = vadd.f32 0.0, %v289
      %v291 = vpop.f32.mrb[0].mxu0
      %v292 = vadd.f32 0.0, %v291
      %v293 = vpop.f32.mrb[0].mxu0
      %v294 = vadd.f32 0.0, %v293
      %295 = vmatprep.mubr.bf16.mxu0 0
      %296 = vmatmul.mubr.bf16.gmra.mrb[0].mxu0 %v251
      %v297 = vpop.f32.mrb[0].mxu0
      %v298 = vadd.f32 0.0, %v297
      %v299 = vpop.f32.mrb[0].mxu0
      %v300 = vadd.f32 0.0, %v299
      %v301 = vpop.f32.mrb[0].mxu0
      %v302 = vpop.f32.mrb[0].mxu0
      %303 = vdwg.mxu0
      %v304 = vld [vmem:[%s2] sm:$0xff]
      %v305 = vld [vmem:[%s2 + $0x8] sm:$0xff]
      %v306 = vld [vmem:[%s2 + $0x10] sm:$0xff]
      %308 = vset.pattern.permute.xlu0 0
      %309 = vperm.xlu0 %308, %v304
      %v310 = vpop.permute.xlu0 %309
      %313 = vset.pattern.permute.xlu0 0
      %314 = vperm.xlu0 %313, %v305
      %v315 = vpop.permute.xlu0 %314
      %318 = vset.pattern.permute.xlu0 0
      %319 = vperm.xlu0 %318, %v306
      %v320 = vpop.permute.xlu0 %319
      %v322 = vmul.f32 %v288, %v310
      %v323 = vmul.f32 %v290, %v310
      %v324 = vmul.f32 %v292, %v315
      %v325 = vmul.f32 %v294, %v315
      %v326 = vmul.f32 %v298, %v320
      %v327 = vmul.f32 %v300, %v320
      %328 = vset.pattern.permute.xlu0 1
      %329 = vperm.xlu0 %328, %v304
      %v330 = vpop.permute.xlu0 %329
      %332 = vset.pattern.permute.xlu0 1
      %333 = vperm.xlu0 %332, %v305
      %v334 = vpop.permute.xlu0 %333
      %336 = vset.pattern.permute.xlu0 1
      %337 = vperm.xlu0 %336, %v306
      %v338 = vpop.permute.xlu0 %337
      %v340 = vadd.f32 %v322, %v330
      %v341 = vadd.f32 %v323, %v330
      %v342 = vadd.f32 %v324, %v334
      %v343 = vadd.f32 %v325, %v334
      %v344 = vadd.f32 %v326, %v338
      %v345 = vadd.f32 %v327, %v338
      %v346 = vmax.f32 %v340, 0.0
      %v347 = vmax.f32 %v341, 0.0
      %v348 = vmax.f32 %v342, 0.0
      %v349 = vmax.f32 %v343, 0.0
      %v350 = vmax.f32 %v344, 0.0
      %v351 = vmax.f32 %v345, 0.0
      %352 = vst [vmem:[%s208] sm:$0xff] %v346
      %353 = vst [vmem:[%s208 + $0x8] sm:$0xff] %v347
      %354 = vst [vmem:[%s208 + $0x10] sm:$0xff] %v348
      %355 = vst [vmem:[%s208 + $0x18] sm:$0xff] %v349
      %356 = vst [vmem:[%s208 + $0x20] sm:$0xff] %v350
      %357 = vst [vmem:[%s208 + $0x28] sm:$0xff] %v351
      %s358 = smul.u32 2, %s19
      %p359 = scmp.lt.s32.totalorder %s18, 1
      %s360 = scalar_select %p359, %s18, 1
      %p361 = scmp.lt.s32.totalorder %s358, 1
      %s362 = scalar_select %p361, %s358, 1
      %s363 = smul.addr %s360, 6
      %s364 = sadd.s32 %s362, %s363
      %s365 = smul.addr %s364, 8
      %s366 = scalar_lea.vmem %s3, %s365
      // Predicated region
      $region33: #{tail_forward.1} parent=31 // pred_check
        %p367 = pneg %p116
      $region34: #{tail_forward.1} parent=31 // pred_check_branch
        %369 = sbr.rel (%p367) target = $region36
      $region35: #{tail_forward.1} parent=31 // pred_region
        %s370 = smul.u32 2, %s19
      $region36: #{tail_forward.1} parent=31 // pred_fallthru
        _
    $region32: #{tail_forward.1} parent=5 // pred_fallthru
      _
    %p371 = scmp.le.s32.totalorder 2, %s9
    // Predicated region
    $region37: #{tail_forward.1} parent=5 // pred_check
      %p372 = pneg %p371
    $region38: #{tail_forward.1} parent=5 // pred_check_branch
      %374 = sbr.rel (%p372) target = $region40
    $region39: #{tail_forward.1} parent=5 // pred_region
      %s375 = ssub.s32 %s9, 2
      // Predicated region
      $region41: #{tail_forward.1} parent=39 // pred_check
        %p376 = pneg %p122
      $region42: #{tail_forward.1} parent=39 // pred_check_branch
        %378 = sbr.rel (%p376) target = $region44
      $region43: #{tail_forward.1} parent=39 // pred_region
        %s379 = smul.u32 2, %s21
        %p380 = scmp.lt.s32.totalorder %s20, 1
        %s381 = scalar_select %p380, %s20, 1
        %p382 = scmp.lt.s32.totalorder %s379, 1
        %s383 = scalar_select %p382, %s379, 1
        %s384 = smul.addr %s381, 6
        %s385 = sadd.s32 %s383, %s384
        %s386 = smul.addr %s385, 8
        %s387 = scalar_lea.vmem %s3, %s386
      $region44: #{tail_forward.1} parent=39 // pred_fallthru
        _
    $region40: #{tail_forward.1} parent=5 // pred_fallthru
      _
  $region6: #{tail_forward.1} parent=0 // loop_footer
    %s13 = sadd.s32 1, %s9
  $region7: #{tail_forward.1} parent=0 // loop_footer_branch
    %8 = sbr.rel target = $region3
  $region8: #{tail_forward.1} parent=0 // loop_exit
    _

</llo_original>
